<compile_context>
chip_gen: v6e
topology: v6e:2x2x1
jax: 0.10.0
libtpu: 0.0.40
codegen_flags: <defaults>
</compile_context>

<pallas_src>
import jax
import jax.numpy as jnp
from jax.experimental import pallas as pl
from jax.experimental.pallas import tpu as pltpu

EPS = 1e-10

# At B=2 the whole problem is one block; with realistic B, add a leading "parallel"
# batch grid axis (2 TCs on v7x) and tile against VMEM instead of full-array blocks.
_CPARAMS = pltpu.CompilerParams(dimension_semantics=("arbitrary",))


# ---------------- conditional branch (c is not None), backbone fused ----------------

def _make_cond_kernel(l2_norm, batch):
    def kernel(c_ref, x_ref, w_ref, b_ref, mw_ref, me_ref, xe_ref, nrm_ref):
        # --- backbone stand-in (fused): global-average-pool over flattened HW + linear
        # TODO(synk): original wraps an arbitrary pretrained ResNet; substituted with a
        # deterministic GAP + linear projection since no checkpoint is available.
        pooled = jnp.mean(x_ref[...], axis=-1)                                # (B, C)
        x_embed = jnp.dot(pooled, w_ref[...],
                          preferred_element_type=jnp.float32) + b_ref[...]    # (B, D)

        # --- masks(c): SMEM-indexed row gather (replaces one_hot + matmul), then ReLU
        rows = [mw_ref[pl.ds(c_ref[b], 1), :] for b in range(batch)]          # B x (1, D)
        mask = jnp.maximum(jnp.concatenate(rows, axis=0), 0.0)                # (B, D)

        masked = x_embed * mask                                               # (B, D)

        # mask.norm(1) and x_embed.norm(2) packed into one (1, 2) output.
        mask_l1 = jnp.sum(jnp.abs(mask))
        embed_l2 = jnp.sqrt(jnp.sum(x_embed * x_embed))
        nrm_ref[...] = jnp.concatenate(
            [jnp.reshape(mask_l1, (1, 1)), jnp.reshape(embed_l2, (1, 1))], axis=1)

        if l2_norm:
            # PyTorch: masked / (||masked||_2 + eps), per row (dim=1)
            norm = jnp.sqrt(jnp.sum(masked * masked, axis=1, keepdims=True)) + EPS
            masked = masked * pl.reciprocal(norm, approx=True)

        me_ref[...] = masked
        xe_ref[...] = x_embed
    return kernel


# ---------------- unconditional branch (c is None), backbone fused ----------------

def _make_uncond_kernel(l2_norm, n_cond):
    def kernel(x_ref, w_ref, b_ref, mw_ref, out_ref):
        pooled = jnp.mean(x_ref[...], axis=-1)                                # (B, C)
        x_embed = jnp.dot(pooled, w_ref[...],
                          preferred_element_type=jnp.float32) + b_ref[...]    # (B, D)
        masks = mw_ref[...]                                                   # (n_cond, D)

        # No ReLU here: the reference multiplies by the raw embedding weights in this path.
        pieces = []
        for j in range(n_cond):                                               # static unroll
            m = x_embed * masks[j:j + 1, :]                                   # (B, D)
            if l2_norm:
                # TODO(synk): reference's `expand_as(masked_embedding.size())` raises in
                # PyTorch; we implement the intended per-(b, cond) L2 normalization.
                norm = jnp.sqrt(jnp.sum(m * m, axis=1, keepdims=True)) + EPS
                m = m * pl.reciprocal(norm, approx=True)
            pieces.append(m)
        pieces.append(x_embed)                       # torch.cat((masked_embedding, x_embed), 1)

        # Single lane-dense full-block store: (B, (n_cond+1)*D) == (2, 160)
        out_ref[...] = jnp.concatenate(pieces, axis=-1)
    return kernel


# ---------------- public forward (mirrors StyleNet.forward) ----------------

def stylenet_forward(x, c, masks_w, bb_w, bb_b, *, l2_norm):
    """c is None -> (B, n_cond+1, D); else -> (masked_embedding, mask_norm, embed_norm, x_embed)."""
    B, C, H, W = x.shape
    n_cond, D = masks_w.shape
    HW = H * W
    x3 = x.reshape(B, C, HW)   # lane-dense spatial axis (contiguous, free reshape)

    if c is None:
        flat = pl.pallas_call(
            _make_uncond_kernel(l2_norm, n_cond),
            out_shape=jax.ShapeDtypeStruct((B, (n_cond + 1) * D), jnp.float32),
            grid=(1,),
            in_specs=[
                pl.BlockSpec((B, C, HW), lambda i: (0, 0, 0)),
                pl.BlockSpec((C, D), lambda i: (0, 0)),
                pl.BlockSpec((1, D), lambda i: (0, 0)),
                pl.BlockSpec((n_cond, D), lambda i: (0, 0)),
            ],
            out_specs=pl.BlockSpec((B, (n_cond + 1) * D), lambda i: (0, 0)),
            compiler_params=_CPARAMS,
        )(x3, bb_w, bb_b, masks_w)
        return flat.reshape(B, n_cond + 1, D)

    masked, x_embed, norms = pl.pallas_call(
        _make_cond_kernel(l2_norm, B),
        out_shape=(
            jax.ShapeDtypeStruct((B, D), jnp.float32),   # masked_embedding
            jax.ShapeDtypeStruct((B, D), jnp.float32),   # x_embed
            jax.ShapeDtypeStruct((1, 2), jnp.float32),   # [mask_norm, embed_norm]
        ),
        grid_spec=pltpu.PrefetchScalarGridSpec(
            num_scalar_prefetch=1,
            grid=(1,),
            in_specs=[
                pl.BlockSpec((B, C, HW), lambda i, cr: (0, 0, 0)),
                pl.BlockSpec((C, D), lambda i, cr: (0, 0)),
                pl.BlockSpec((1, D), lambda i, cr: (0, 0)),
                pl.BlockSpec((n_cond, D), lambda i, cr: (0, 0)),
            ],
            out_specs=(
                pl.BlockSpec((B, D), lambda i, cr: (0, 0)),
                pl.BlockSpec((B, D), lambda i, cr: (0, 0)),
                pl.BlockSpec((1, 2), lambda i, cr: (0, 0)),
            ),
        ),
        compiler_params=_CPARAMS,
    )(c.astype(jnp.int32), x3, bb_w, bb_b, masks_w)

    mask_norm = norms[0, 0]
    embed_norm = norms[0, 1]
    return masked, mask_norm, embed_norm, x_embed


if __name__ == "__main__":
    B, C, H, W = 2, 4, 16, 16
    embed_dim = 32
    n_conditions = 4
    l2_norm = True

    key = jax.random.PRNGKey(0)
    kx, kc, km, kw, kb = jax.random.split(key, 5)

    x = jax.random.normal(kx, (B, C, H, W), jnp.float32)
    c = jax.random.randint(kc, (B,), 0, n_conditions)

    # nn.Embedding(n_conditions, embed_dim) with weight ~ Normal(0.9, 0.7)
    masks_w = jax.random.normal(km, (n_conditions, embed_dim), jnp.float32) * 0.7 + 0.9
    # deterministic synthetic backbone params
    bb_w = jax.random.normal(kw, (C, embed_dim), jnp.float32) * 0.1
    bb_b = jax.random.normal(kb, (1, embed_dim), jnp.float32) * 0.01

    # branch: c is not None -> (masked_embedding, mask_norm, embed_norm, x_embed)
    masked, mask_norm, embed_norm, x_embed_out = stylenet_forward(
        x, c, masks_w, bb_w, bb_b, l2_norm=l2_norm)

    # branch: c is None -> cat((masked_embedding, x_embed.unsqueeze(1)), dim=1)
    out_uncond = stylenet_forward(x, None, masks_w, bb_w, bb_b, l2_norm=l2_norm)

    jax.block_until_ready((masked, mask_norm, embed_norm, x_embed_out, out_uncond))
    print("KERNEL_OK")
</pallas_src>

<mosaic_0001>
module attributes {stable_mosaic.version = 11 : i64} {
  func.func @kernel(%arg0: i32, %arg1: memref<2xi32, #tpu.memory_space<smem>>, %arg2: memref<2x4x256xf32, #tpu.memory_space<vmem>>, %arg3: memref<4x32xf32, #tpu.memory_space<vmem>>, %arg4: memref<1x32xf32, #tpu.memory_space<vmem>>, %arg5: memref<4x32xf32, #tpu.memory_space<vmem>>, %arg6: memref<2x32xf32, #tpu.memory_space<vmem>>, %arg7: memref<2x32xf32, #tpu.memory_space<vmem>>, %arg8: memref<1x2xf32, #tpu.memory_space<vmem>>) attributes {dimension_semantics = [#tpu.dimension_semantics<arbitrary>], iteration_bounds = array<i64: 1>, scalar_prefetch = 1 : i64, scratch_operands = 0 : i64, tpu.core_type = #tpu.core_type<tc>, window_params = [{pipeline_mode = #tpu.pipeline_mode<synchronous>, transform_indices = @transform_0, window_bounds = array<i64: 2, 4, 256>}, {pipeline_mode = #tpu.pipeline_mode<synchronous>, transform_indices = @transform_1, window_bounds = array<i64: 4, 32>}, {pipeline_mode = #tpu.pipeline_mode<synchronous>, transform_indices = @transform_2, window_bounds = array<i64: 1, 32>}, {pipeline_mode = #tpu.pipeline_mode<synchronous>, transform_indices = @transform_3, window_bounds = array<i64: 4, 32>}, {pipeline_mode = #tpu.pipeline_mode<synchronous>, transform_indices = @transform_4, window_bounds = array<i64: 2, 32>}, {pipeline_mode = #tpu.pipeline_mode<synchronous>, transform_indices = @transform_5, window_bounds = array<i64: 2, 32>}, {pipeline_mode = #tpu.pipeline_mode<synchronous>, transform_indices = @transform_6, window_bounds = array<i64: 1, 2>}]} {
    %c0 = arith.constant 0 : index
    %c0_0 = arith.constant 0 : index
    %c0_1 = arith.constant 0 : index
    %0 = vector.load %arg2[%c0, %c0_0, %c0_1] : memref<2x4x256xf32, #tpu.memory_space<vmem>>, vector<2x4x256xf32>
    %cst = arith.constant dense<0.000000e+00> : vector<2x4xf32>
    %1 = vector.multi_reduction <add>, %0, %cst [2] : vector<2x4x256xf32> to vector<2x4xf32>
    %cst_2 = arith.constant 2.560000e+02 : f32
    %2 = vector.broadcast %cst_2 : f32 to vector<2x4xf32>
    %3 = arith.divf %1, %2 : vector<2x4xf32>
    %c0_3 = arith.constant 0 : index
    %c0_4 = arith.constant 0 : index
    %4 = vector.load %arg3[%c0_3, %c0_4] : memref<4x32xf32, #tpu.memory_space<vmem>>, vector<4x32xf32>
    %cst_5 = arith.constant dense<0.000000e+00> : vector<2x32xf32>
    %5 = tpu.matmul %3, %4, %cst_5 {dimension_numbers = #tpu.dot_dimension_numbers<[1], [0], [0], [1], [0, 0, 1, 1], [], []>} : vector<2x4xf32>, vector<4x32xf32>, vector<2x32xf32> -> vector<2x32xf32>
    %c0_6 = arith.constant 0 : index
    %c0_7 = arith.constant 0 : index
    %6 = vector.load %arg4[%c0_6, %c0_7] : memref<1x32xf32, #tpu.memory_space<vmem>>, vector<1x32xf32>
    %7 = vector.broadcast %6 : vector<1x32xf32> to vector<2x32xf32>
    %8 = arith.addf %5, %7 : vector<2x32xf32>
    %c0_8 = arith.constant 0 : index
    %9 = memref.load %arg1[%c0_8] : memref<2xi32, #tpu.memory_space<smem>>
    %10 = arith.index_cast %9 : i32 to index
    %c0_9 = arith.constant 0 : index
    %11 = vector.load %arg5[%10, %c0_9] : memref<4x32xf32, #tpu.memory_space<vmem>>, vector<1x32xf32>
    %c1 = arith.constant 1 : index
    %12 = memref.load %arg1[%c1] : memref<2xi32, #tpu.memory_space<smem>>
    %13 = arith.index_cast %12 : i32 to index
    %c0_10 = arith.constant 0 : index
    %14 = vector.load %arg5[%13, %c0_10] : memref<4x32xf32, #tpu.memory_space<vmem>>, vector<1x32xf32>
    %15 = tpu.concatenate %11, %14 in 0 : vector<1x32xf32>, vector<1x32xf32> -> vector<2x32xf32>
    %cst_11 = arith.constant 0.000000e+00 : f32
    %16 = vector.broadcast %cst_11 : f32 to vector<2x32xf32>
    %17 = arith.maximumf %15, %16 : vector<2x32xf32>
    %18 = arith.mulf %8, %17 : vector<2x32xf32>
    %19 = math.absf %17 : vector<2x32xf32>
    %20 = vector.shape_cast %19 : vector<2x32xf32> to vector<1x2x32xf32>
    %cst_12 = arith.constant dense<0.000000e+00> : vector<1xf32>
    %21 = vector.multi_reduction <add>, %20, %cst_12 [1, 2] : vector<1x2x32xf32> to vector<1xf32>
    %22 = vector.shape_cast %21 : vector<1xf32> to vector<1x1x1xf32>
    %23 = vector.extract %22[0, 0, 0] : f32 from vector<1x1x1xf32>
    %24 = arith.mulf %8, %8 : vector<2x32xf32>
    %25 = vector.shape_cast %24 : vector<2x32xf32> to vector<1x2x32xf32>
    %cst_13 = arith.constant dense<0.000000e+00> : vector<1xf32>
    %26 = vector.multi_reduction <add>, %25, %cst_13 [1, 2] : vector<1x2x32xf32> to vector<1xf32>
    %27 = vector.shape_cast %26 : vector<1xf32> to vector<1x1x1xf32>
    %28 = vector.extract %27[0, 0, 0] : f32 from vector<1x1x1xf32>
    %29 = math.sqrt %28 : f32
    %30 = vector.broadcast %23 : f32 to vector<1x1xf32>
    %31 = vector.broadcast %29 : f32 to vector<1x1xf32>
    %32 = tpu.concatenate %30, %31 in 1 : vector<1x1xf32>, vector<1x1xf32> -> vector<1x2xf32>
    %c0_14 = arith.constant 0 : index
    %c0_15 = arith.constant 0 : index
    %33 = vector.load %arg8[%c0_14, %c0_15] : memref<1x2xf32, #tpu.memory_space<vmem>>, vector<1x2xf32>
    tpu.vector_store %arg8[%c0_14, %c0_15], %32 {strides = array<i32>} : memref<1x2xf32, #tpu.memory_space<vmem>>, vector<1x2xf32>,
    %34 = arith.mulf %18, %18 : vector<2x32xf32>
    %cst_16 = arith.constant dense<0.000000e+00> : vector<2xf32>
    %35 = vector.multi_reduction <add>, %34, %cst_16 [1] : vector<2x32xf32> to vector<2xf32>
    %36 = vector.shape_cast %35 : vector<2xf32> to vector<2x1xf32>
    %37 = math.sqrt %36 : vector<2x1xf32>
    %cst_17 = arith.constant 1.000000e-10 : f32
    %38 = vector.broadcast %cst_17 : f32 to vector<2x1xf32>
    %39 = arith.addf %37, %38 : vector<2x1xf32>
    %40 = tpu.reciprocal %39 {approx = true} : vector<2x1xf32> -> vector<2x1xf32>
    %41 = vector.broadcast %40 : vector<2x1xf32> to vector<2x32xf32>
    %42 = arith.mulf %18, %41 : vector<2x32xf32>
    %c0_18 = arith.constant 0 : index
    %c0_19 = arith.constant 0 : index
    %43 = vector.load %arg6[%c0_18, %c0_19] : memref<2x32xf32, #tpu.memory_space<vmem>>, vector<2x32xf32>
    tpu.vector_store %arg6[%c0_18, %c0_19], %42 {strides = array<i32>} : memref<2x32xf32, #tpu.memory_space<vmem>>, vector<2x32xf32>,
    %c0_20 = arith.constant 0 : index
    %c0_21 = arith.constant 0 : index
    %44 = vector.load %arg7[%c0_20, %c0_21] : memref<2x32xf32, #tpu.memory_space<vmem>>, vector<2x32xf32>
    tpu.vector_store %arg7[%c0_20, %c0_21], %8 {strides = array<i32>} : memref<2x32xf32, #tpu.memory_space<vmem>>, vector<2x32xf32>,
    return
  }
  func.func @transform_0(%arg0: i32, %arg1: memref<2xi32, #tpu.memory_space<smem>>) -> (i32, i32, i32) {
    %c0_i32 = arith.constant 0 : i32
    %c0_i32_0 = arith.constant 0 : i32
    %c0_i32_1 = arith.constant 0 : i32
    %c0_i32_2 = arith.constant 0 : i32
    return %c0_i32, %c0_i32_0, %c0_i32_1 : i32, i32, i32
  }
  func.func @transform_1(%arg0: i32, %arg1: memref<2xi32, #tpu.memory_space<smem>>) -> (i32, i32) {
    %c0_i32 = arith.constant 0 : i32
    %c0_i32_0 = arith.constant 0 : i32
    %c0_i32_1 = arith.constant 0 : i32
    return %c0_i32, %c0_i32_0 : i32, i32
  }
  func.func @transform_2(%arg0: i32, %arg1: memref<2xi32, #tpu.memory_space<smem>>) -> (i32, i32) {
    %c0_i32 = arith.constant 0 : i32
    %c0_i32_0 = arith.constant 0 : i32
    %c0_i32_1 = arith.constant 0 : i32
    return %c0_i32, %c0_i32_0 : i32, i32
  }
  func.func @transform_3(%arg0: i32, %arg1: memref<2xi32, #tpu.memory_space<smem>>) -> (i32, i32) {
    %c0_i32 = arith.constant 0 : i32
    %c0_i32_0 = arith.constant 0 : i32
    %c0_i32_1 = arith.constant 0 : i32
    return %c0_i32, %c0_i32_0 : i32, i32
  }
  func.func @transform_4(%arg0: i32, %arg1: memref<2xi32, #tpu.memory_space<smem>>) -> (i32, i32) {
    %c0_i32 = arith.constant 0 : i32
    %c0_i32_0 = arith.constant 0 : i32
    %c0_i32_1 = arith.constant 0 : i32
    return %c0_i32, %c0_i32_0 : i32, i32
  }
  func.func @transform_5(%arg0: i32, %arg1: memref<2xi32, #tpu.memory_space<smem>>) -> (i32, i32) {
    %c0_i32 = arith.constant 0 : i32
    %c0_i32_0 = arith.constant 0 : i32
    %c0_i32_1 = arith.constant 0 : i32
    return %c0_i32, %c0_i32_0 : i32, i32
  }
  func.func @transform_6(%arg0: i32, %arg1: memref<2xi32, #tpu.memory_space<smem>>) -> (i32, i32) {
    %c0_i32 = arith.constant 0 : i32
    %c0_i32_0 = arith.constant 0 : i32
    %c0_i32_1 = arith.constant 0 : i32
    return %c0_i32, %c0_i32_0 : i32, i32
  }
}

</mosaic_0001>

<llo_original>
// kernel: tpu_custom_call.1
$region0: #{tpu_custom_call.1}
  #allocation0 [shape = 'u32[]', space=smem, size = 0x4, offset = 0x4, fixed_abs, tag = 'smem constant byte address 0x4 - core index']
  #allocation1 [shape = 'u32[144,128]{1,0:T(1,128)}', space=vmem, size = 0x12000, scoped, tag = 'internal scratch']
  #allocation2 [shape = 's32[1]{0}', space=sflag, size = 0x4, scoped, tag = 'scoped memory for tpu_custom_call.1']
  #allocation3 [shape = 'u8[512]{0}', space=smem, size = 0x200, scoped, tag = 'prefetched SMEM operand 0']
  %s0 = inlined_call_operand.hbm [shape: s32[2], index: 0, kind: input, shape index: {}]
  %s1 = inlined_call_operand.hbm [shape: f32[2,4,256], index: 1, kind: input, shape index: {}]
  %s2 = inlined_call_operand.hbm [shape: f32[4,32], index: 2, kind: input, shape index: {}]
  %s3 = inlined_call_operand.vmem [shape: f32[1,32], index: 3, kind: input, shape index: {}]
  %s4 = inlined_call_operand.vmem [shape: f32[4,32], index: 4, kind: input, shape index: {}]
  %s5 = inlined_call_operand.hbm [shape: f32[2,32], index: 5, kind: output, shape index: {0}]
  %s6 = inlined_call_operand.hbm [shape: f32[2,32], index: 6, kind: output, shape index: {1}]
  %s7 = inlined_call_operand.hbm [shape: f32[1,2], index: 7, kind: output, shape index: {2}]
  %8 = xla_tuple %s5, %s6, %s7
  %s9 = sld [smem:[#allocation0]]
  $region50: #{tpu_custom_call.1} parent=0
    _
  %s11 = ssub.s32 1, %s9
  %s12 = scalar_select 0, %s11, %s9
  %14 = dma.hbm_to_smem %s0, 16, [#allocation3], [#allocation2]
  %15 = dma.done [#allocation2], 16
  %16 = sfence
  $region1: #{tpu_custom_call.1} parent=0
    #allocation4 [shape = 'u8[8192]{0}', space=vmem, size = 0x2000, scoped, tag = 'input window, operand 1, single buffered']
    #allocation5 [shape = 's32[1]{0}', space=sflag, size = 0x4, scoped, tag = 'scoped memory for tpu_custom_call.1']
    #allocation6 [shape = 's32[1]{0}', space=sflag, size = 0x4, scoped, tag = 'scoped memory for tpu_custom_call.1']
    #allocation7 [shape = 'u8[2048]{0}', space=vmem, size = 0x800, scoped, tag = 'input window, operand 2, single buffered']
    #allocation8 [shape = 's32[1]{0}', space=sflag, size = 0x4, scoped, tag = 'scoped memory for tpu_custom_call.1']
    #allocation9 [shape = 'u8[1024]{0}', space=vmem, size = 0x400, scoped, tag = 'output window, operand 0, single buffered']
    #allocation10 [shape = 'u8[1024]{0}', space=vmem, size = 0x400, scoped, tag = 'output window, operand 1, single buffered']
    #allocation11 [shape = 's32[1]{0}', space=sflag, size = 0x4, scoped, tag = 'scoped memory for tpu_custom_call.1']
    #allocation12 [shape = 'u8[512]{0}', space=vmem, size = 0x400, scoped, tag = 'output window, operand 2, single buffered']
    %17 = vsyncpa [#allocation5], 0
    %18 = vsyncpa [#allocation8], 0
    %19 = vsyncpa [#allocation6], 0
    %20 = vsyncpa [#allocation11], 0
    // Predicated region
    $region2: #{tpu_custom_call.1} parent=1 // pred_check
      _
    $region3: #{tpu_custom_call.1} parent=1 // pred_check_branch
      %22 = sbr.rel (0) target = $region5
    $region4: #{tpu_custom_call.1} parent=1 // pred_region
      %s24 = ssub.s32 256, 256
      %25 = vsyncadd [#allocation5], %s24
      %s26 = sshll.u32 [#allocation4], 4
      %s27 = int_to_ptr.vmem [resolvable:$true] %s26
      %32 = dma.hbm_to_vmem [thread:$0]  %s1, 256, %s27, [#allocation5], 128, 128, 8
    $region5: #{tpu_custom_call.1} parent=1 // pred_fallthru
      _
    // Predicated region
    $region6: #{tpu_custom_call.1} parent=1 // pred_check
      _
    $region7: #{tpu_custom_call.1} parent=1 // pred_check_branch
      %34 = sbr.rel (0) target = $region9
    $region8: #{tpu_custom_call.1} parent=1 // pred_region
      %s36 = ssub.s32 64, 64
      %37 = vsyncadd [#allocation8], %s36
      %s39 = sshll.u32 [#allocation7], 4
      %s40 = int_to_ptr.vmem [resolvable:$true] %s39
      %42 = dma.hbm_to_vmem [thread:$0]  %s2, 64, %s40, [#allocation8]
    $region9: #{tpu_custom_call.1} parent=1 // pred_fallthru
      _
    // Predicated region
    $region10: #{tpu_custom_call.1} parent=1 // pred_check
      _
    $region11: #{tpu_custom_call.1} parent=1 // pred_check_branch
      %44 = sbr.rel (0) target = $region13
    $region12: #{tpu_custom_call.1} parent=1 // pred_region
      _
    $region13: #{tpu_custom_call.1} parent=1 // pred_fallthru
      _
    // Predicated region
    $region14: #{tpu_custom_call.1} parent=1 // pred_check
      _
    $region15: #{tpu_custom_call.1} parent=1 // pred_check_branch
      %46 = sbr.rel (0) target = $region17
    $region16: #{tpu_custom_call.1} parent=1 // pred_region
      _
    $region17: #{tpu_custom_call.1} parent=1 // pred_fallthru
      _
    // Predicated region
    $region18: #{tpu_custom_call.1} parent=1 // pred_check
      _
    $region19: #{tpu_custom_call.1} parent=1 // pred_check_branch
      %48 = sbr.rel (0) target = $region21
    $region20: #{tpu_custom_call.1} parent=1 // pred_region
      %49 = dma.done [#allocation5], 256
    $region21: #{tpu_custom_call.1} parent=1 // pred_fallthru
      _
    // Predicated region
    $region22: #{tpu_custom_call.1} parent=1 // pred_check
      _
    $region23: #{tpu_custom_call.1} parent=1 // pred_check_branch
      %51 = sbr.rel (0) target = $region25
    $region24: #{tpu_custom_call.1} parent=1 // pred_region
      %52 = dma.done [#allocation8], 64
    $region25: #{tpu_custom_call.1} parent=1 // pred_fallthru
      _
    %v53 = vld [vmem:[#allocation4] sm:$0xff]
    %v54 = vld [vmem:[#allocation4 + $0x8] sm:$0xff]
    %v57 = vcombine.high %v53, %v53
    %v58 = vcombine.high %v54, %v54
    %vm61 = vcmask 1043456
    %v62 = vsel %vm61, %v53, 0.0
    %v63 = vsel %vm61, %v57, 0.0
    %v64 = vadd.f32 %v62, %v63
    %65 = vadd.xlane.f32.xlu0 %v64
    %v66 = vpop.xlane.xlu0 %65
    %v67 = vsel %vm61, %v54, 0.0
    %v68 = vsel %vm61, %v58, 0.0
    %v69 = vadd.f32 %v67, %v68
    %70 = vadd.xlane.f32.xlu0 %v69
    %v71 = vpop.xlane.xlu0 %70
    %v72 = vrcp.pop 256.0
    %v73 = vmul.f32 %v66, %v72
    %v74 = vmul.f32 %v71, %v72
    %v75 = vld [vmem:[#allocation7] sm:$0xf]
    %v76 = vld [vmem:[%s3] sm:$0x1]
    %v78 = vlaneseq
    %v79 = vshrl.u32 %v78, 7
    %v80 = vsub.s32 0, %v79
    %v81 = vrot.slane %v76, %v80
    %v85 = vlaneseq
    %v86 = vand.u32 %v85, 127
    %v87 = vlaneseq
    %v88 = vshrl.u32 %v87, 7
    %v89 = vsub.s32 %v86, %v88
    %v90 = vrot.slane %v73, %v89
    %v91 = vlaneseq
    %v92 = vshrl.u32 %v91, 7
    %v93 = vsub.s32 %v86, %v92
    %v94 = vrot.slane %v74, %v93
    %vm95 = vcmask 1041409
    %v96 = vsel %vm95, %v94, %v90
    %vm97 = vcmask 31744
    %v98 = vsel %vm97, %v96, 0
    %v101 = vsel %vm61, %v75, 0
    %103 = vmatprep.subr.mxu0 0.0
    %104 = vmatpush1.msra.mxu0 0.0
    %105 = vmatprep.subr.mxu0 0.0
    %106 = vmatpush1.msra.mxu0 0.0
    %107 = vmatprep.subr.mxu0 0.0
    %108 = vmatpush1.msra.mxu0 0.0
    %109 = vmatprep.subr.mxu0 0.0
    %110 = vmatpush1.msra.mxu0 0.0
    %111 = vmatprep.subr.mxu0 0.0
    %112 = vmatpush1.msra.mxu0 0.0
    %113 = vmatprep.subr.mxu0 0.0
    %114 = vmatpush1.msra.mxu0 0.0
    %115 = vmatprep.subr.mxu0 0.0
    %116 = vmatpush1.msra.mxu0 0.0
    %117 = vmatprep.subr.mxu0 0.0
    %118 = vmatpush1.msra.mxu0 0.0
    %119 = vmatprep.subr.mxu0 0.0
    %120 = vmatpush1.msra.mxu0 0.0
    %121 = vmatprep.subr.mxu0 0.0
    %122 = vmatpush1.msra.mxu0 0.0
    %123 = vmatprep.subr.mxu0 0.0
    %124 = vmatpush1.msra.mxu0 0.0
    %125 = vmatprep.subr.mxu0 0.0
    %126 = vmatpush1.msra.mxu0 0.0
    %127 = vmatprep.subr.mxu0 0.0
    %128 = vmatpush1.msra.mxu0 0.0
    %129 = vmatprep.subr.mxu0 0.0
    %130 = vmatpush1.msra.mxu0 0.0
    %131 = vmatprep.subr.mxu0 0.0
    %132 = vmatpush1.msra.mxu0 0.0
    %133 = vmatprep.subr.mxu0 0.0
    %134 = vmatpush1.msra.mxu0 %v101
    %135 = vmatprep.subr.mxu0 0.0
    %136 = vmatpush2.msra.mxu0 0.0
    %137 = vmatprep.subr.mxu0 0.0
    %138 = vmatpush2.msra.mxu0 0.0
    %139 = vmatprep.subr.mxu0 0.0
    %140 = vmatpush2.msra.mxu0 0.0
    %141 = vmatprep.subr.mxu0 0.0
    %142 = vmatpush2.msra.mxu0 0.0
    %143 = vmatprep.subr.mxu0 0.0
    %144 = vmatpush2.msra.mxu0 0.0
    %145 = vmatprep.subr.mxu0 0.0
    %146 = vmatpush2.msra.mxu0 0.0
    %147 = vmatprep.subr.mxu0 0.0
    %148 = vmatpush2.msra.mxu0 0.0
    %149 = vmatprep.subr.mxu0 0.0
    %150 = vmatpush2.msra.mxu0 0.0
    %151 = vmatprep.subr.mxu0 0.0
    %152 = vmatpush2.msra.mxu0 0.0
    %153 = vmatprep.subr.mxu0 0.0
    %154 = vmatpush2.msra.mxu0 0.0
    %155 = vmatprep.subr.mxu0 0.0
    %156 = vmatpush2.msra.mxu0 0.0
    %157 = vmatprep.subr.mxu0 0.0
    %158 = vmatpush2.msra.mxu0 0.0
    %159 = vmatprep.subr.mxu0 0.0
    %160 = vmatpush2.msra.mxu0 0.0
    %161 = vmatprep.subr.mxu0 0.0
    %162 = vmatpush2.msra.mxu0 0.0
    %163 = vmatprep.subr.mxu0 0.0
    %164 = vmatpush2.msra.mxu0 0.0
    %165 = vmatprep.subr.mxu0 0.0
    %166 = vmatpush2.msra.mxu0 0.0
    %167 = vmatprep.mubr.f32.mxu0 0.0
    %168 = vmatmul.mubr.f32.gmra.mxu0 %v98
    %v169 = vpop.f32.mrf.mxu0
    %v170 = vadd.f32 %v81, %v169
    %v171 = vpop.f32.mrf.mxu0
    %172 = vdwg.mxu0
    %s173 = sld [smem:[#allocation3]]
    %s174 = scalar_lea.vmem %s4, %s173
    %v175 = vld [vmem:[%s174] sm:$0x1]
    %s176 = sld [smem:[#allocation3 + $0x1]]
    %s177 = scalar_lea.vmem %s4, %s176
    %v178 = vld [vmem:[%s177] sm:$0x1]
    %v180 = vrot.slane %v178, 7
    %vm182 = vcmask 1040384
    %v183 = vsel %vm182, %v175, %v180
    %v184 = vmax.f32 %v183, 0.0
    %v185 = vmul.f32 %v170, %v184
    %v186 = vand.u32 2147483647, %v184
    %vm187 = vcmask 254976
    %v188 = vsel %vm187, %v186, 0.0
    %189 = vadd.xlane.f32.xlu0 %v188
    %v190 = vpop.xlane.xlu0 %189
    %v191 = vrot.slane %v190, 4
    %v192 = vadd.f32 %v190, %v191
    %v193 = vrot.slane %v192, 2
    %v194 = vadd.f32 %v192, %v193
    %v195 = vrot.slane %v194, 1
    %v196 = vadd.f32 %v194, %v195
    %s197 = vtos %v196
    %v198 = vmul.f32 %v170, %v170
    %v199 = vsel %vm187, %v198, 0.0
    %200 = vadd.xlane.f32.xlu0 %v199
    %v201 = vpop.xlane.xlu0 %200
    %v202 = vrot.slane %v201, 4
    %v203 = vadd.f32 %v201, %v202
    %v204 = vrot.slane %v203, 2
    %v205 = vadd.f32 %v203, %v204
    %v206 = vrot.slane %v205, 1
    %v207 = vadd.f32 %v205, %v206
    %s208 = vtos %v207
    %v209 = vstv %s208
    %v210 = vrsqrt.pop %v209
    %v211 = vmul.f32 %v209, %v210
    %vm212 = vcmp.eq.f32.partialorder %v209, inf
    %v213 = vsel %vm212, %v209, %v211
    %vm214 = vcmp.eq.f32.partialorder %v209, 0.0
    %v215 = vand.u32 %v209, 2147483648
    %v216 = vsel %vm214, %v215, %v213
    %s217 = vtos %v216
    %v218 = vstv %s197
    %v219 = vstv %s217
    %vm220 = vcmask 7168
    %v221 = vsel %vm220, %v218, %v219
    %vm222 = vcmask 8192
    %223 = vst.msk [vmem:[#allocation12] sm:$0x1] %vm222, %v221
    %v224 = vmul.f32 %v185, %v185
    %v225 = vsel %vm187, %v224, 0.0
    %226 = vadd.xlane.f32.xlu0 %v225
    %v227 = vpop.xlane.xlu0 %226
    %v228 = vrsqrt.pop %v227
    %v229 = vmul.f32 %v227, %v228
    %vm230 = vcmp.eq.f32.partialorder %v227, inf
    %v231 = vsel %vm230, %v227, %v229
    %vm232 = vcmp.eq.f32.partialorder %v227, 0.0
    %v233 = vand.u32 %v227, 2147483648
    %v234 = vsel %vm232, %v233, %v231
    %v235 = vadd.f32 %v234, 1e-10
    %v236 = vrcp.pop %v235
    %v237 = vmul.f32 %v185, %v236
    %238 = vst.msk [vmem:[#allocation9] sm:$0x3] %vm187, %v237
    %239 = vst.msk [vmem:[#allocation10] sm:$0x3] %vm187, %v170
    // Predicated region
    $region26: #{tpu_custom_call.1} parent=1 // pred_check
      _
    $region27: #{tpu_custom_call.1} parent=1 // pred_check_branch
      %241 = sbr.rel (0) target = $region29
    $region28: #{tpu_custom_call.1} parent=1 // pred_region
      %s243 = ssub.s32 32, 32
      %244 = vsyncadd [#allocation6], %s243
      %s246 = sshll.u32 [#allocation9], 4
      %s247 = int_to_ptr.vmem [resolvable:$true] %s246
      %249 = dma.vmem_to_hbm [thread:$0]  %s247, 32, %s5, [#allocation6]
    $region29: #{tpu_custom_call.1} parent=1 // pred_fallthru
      _
    // Predicated region
    $region30: #{tpu_custom_call.1} parent=1 // pred_check
      _
    $region31: #{tpu_custom_call.1} parent=1 // pred_check_branch
      %251 = sbr.rel (0) target = $region33
    $region32: #{tpu_custom_call.1} parent=1 // pred_region
      %s253 = ssub.s32 32, 32
      %254 = vsyncadd [#allocation11], %s253
      %s256 = sshll.u32 [#allocation10], 4
      %s257 = int_to_ptr.vmem [resolvable:$true] %s256
      %259 = dma.vmem_to_hbm [thread:$0]  %s257, 32, %s6, [#allocation11]
    $region33: #{tpu_custom_call.1} parent=1 // pred_fallthru
      _
    // Predicated region
    $region34: #{tpu_custom_call.1} parent=1 // pred_check
      _
    $region35: #{tpu_custom_call.1} parent=1 // pred_check_branch
      %261 = sbr.rel (0) target = $region37
    $region36: #{tpu_custom_call.1} parent=1 // pred_region
      %s263 = ssub.s32 16, 16
      %264 = vsyncadd [#allocation11], %s263
      %s266 = sshll.u32 [#allocation12], 4
      %s267 = int_to_ptr.vmem [resolvable:$true] %s266
      %269 = dma.vmem_to_hbm [thread:$0]  %s267, 16, %s7, [#allocation11]
    $region37: #{tpu_custom_call.1} parent=1 // pred_fallthru
      _
    // Predicated region
    $region38: #{tpu_custom_call.1} parent=1 // pred_check
      _
    $region39: #{tpu_custom_call.1} parent=1 // pred_check_branch
      %271 = sbr.rel (0) target = $region41
    $region40: #{tpu_custom_call.1} parent=1 // pred_region
      %272 = dma.done [#allocation6], 32
    $region41: #{tpu_custom_call.1} parent=1 // pred_fallthru
      _
    // Predicated region
    $region42: #{tpu_custom_call.1} parent=1 // pred_check
      _
    $region43: #{tpu_custom_call.1} parent=1 // pred_check_branch
      %274 = sbr.rel (0) target = $region45
    $region44: #{tpu_custom_call.1} parent=1 // pred_region
      %275 = dma.done [#allocation11], 32
    $region45: #{tpu_custom_call.1} parent=1 // pred_fallthru
      _
    // Predicated region
    $region46: #{tpu_custom_call.1} parent=1 // pred_check
      _
    $region47: #{tpu_custom_call.1} parent=1 // pred_check_branch
      %277 = sbr.rel (0) target = $region49
    $region48: #{tpu_custom_call.1} parent=1 // pred_region
      %278 = dma.done [#allocation11], 16
    $region49: #{tpu_custom_call.1} parent=1 // pred_fallthru
      _
    %279 = vsyncpa [#allocation5], 1
    %280 = vsyncpa [#allocation8], 1
    %281 = vsyncpa [#allocation6], 1
    %282 = vsyncpa [#allocation11], 1

</llo_original>
